<compile_context>
chip_gen: v6e
topology: v6e:2x2x1
jax: 0.10.0
libtpu: 0.0.40
codegen_flags: <defaults>
</compile_context>

<pallas_src>
import jax
import jax.numpy as jnp
from jax.experimental import pallas as pl
from jax.experimental.pallas import tpu as pltpu

_LANE = 128                 # padded hidden width (48 -> 128 lanes inside the slab)
_HIDDEN = 48
_W_ROWS = 3 * _LANE         # three (128, 128) weight blocks stacked along sublanes
_SLAB_ROWS = _W_ROWS + 8    # plus one 8-row sublane tile whose first 3 rows hold the biases


def _round_up(x, m):
    return (x + m - 1) // m * m


def actor_kernel(obs_ref, params_ref, out_ref):
    """Fused 3-layer MLP on one batch tile.

    obs_ref:    (tile_b, obs_dim)   -- unpadded features (obs_dim is 8-aligned for BipedalWalker)
    params_ref: (392, 128)          -- packed, zero-padded W1/W2/W3 + biases (VMEM-resident)
    out_ref:    (tile_b, act_dim)   -- real action width, masked store
    """
    obs_dim = obs_ref.shape[-1]
    act_dim = out_ref.shape[-1]

    x = obs_ref[...]                                        # (tile_b, obs_dim) f32

    w1 = params_ref[0:obs_dim, :]                           # (obs_dim, 128), 8-aligned row slice
    w2 = params_ref[1 * _LANE:2 * _LANE, :]                 # (128, 128)
    w3 = params_ref[2 * _LANE:3 * _LANE, :]                 # (128, 128)
    b1 = params_ref[_W_ROWS + 0:_W_ROWS + 1, :]             # (1, 128), broadcast over rows
    b2 = params_ref[_W_ROWS + 1:_W_ROWS + 2, :]
    b3 = params_ref[_W_ROWS + 2:_W_ROWS + 3, :]

    h1 = jnp.maximum(jnp.dot(x, w1, preferred_element_type=jnp.float32) + b1, 0.0)
    h2 = jnp.maximum(jnp.dot(h1, w2, preferred_element_type=jnp.float32) + b2, 0.0)
    z3 = jnp.dot(h2, w3, preferred_element_type=jnp.float32) + b3
    out_ref[...] = jnp.tanh(z3[:, :act_dim]).astype(out_ref.dtype)


def pack_actor_params(params, observation_dim, action_dim):
    """Pack w1,b1,w2,b2,w3,b3 into one zero-padded (392, 128) f32 slab.

    Zero padding keeps the math exact: padded hidden lanes get zero weight columns + zero bias
    (ReLU(0)=0), and those zero lanes hit zero weight rows in the next layer.
    """
    slab = jnp.zeros((_SLAB_ROWS, _LANE), jnp.float32)
    slab = slab.at[0:observation_dim, 0:_HIDDEN].set(params["w1"])
    slab = slab.at[_LANE:_LANE + _HIDDEN, 0:_HIDDEN].set(params["w2"])
    slab = slab.at[2 * _LANE:2 * _LANE + _HIDDEN, 0:action_dim].set(params["w3"])
    slab = slab.at[_W_ROWS + 0, 0:_HIDDEN].set(params["b1"])
    slab = slab.at[_W_ROWS + 1, 0:_HIDDEN].set(params["b2"])
    slab = slab.at[_W_ROWS + 2, 0:action_dim].set(params["b3"])
    return slab


def _choose_tiling(batch, max_tile_b, min_split_tile=128):
    """Pick (tile_b, padded_batch) with bounded padding waste and >=2 grid steps when possible."""
    b8 = _round_up(batch, 8)
    n_tiles = pl.cdiv(b8, max_tile_b)
    # Megacore (v7x): guarantee at least 2 grid steps once each half-tile would still be >=128 rows.
    if n_tiles == 1 and b8 >= 2 * min_split_tile:
        n_tiles = 2
    tile_b = _round_up(pl.cdiv(b8, n_tiles), 8)   # balanced tiles -> waste < 8 rows per tile
    return tile_b, tile_b * n_tiles


def actor_forward(observation, packed_params, action_dim, *, max_tile_b=1024):
    """observation: (B, obs_dim) f32. packed_params: (392, 128) f32 slab. Returns (B, action_dim)."""
    B, obs_dim = observation.shape
    tile_b, b_pad = _choose_tiling(B, max_tile_b)

    obs_in = observation.astype(jnp.float32)
    if b_pad != B:
        # Small batch-only pad (<= a few sublanes per tile); feature dim stays unpadded.
        obs_in = jnp.pad(obs_in, ((0, b_pad - B), (0, 0)))

    out_p = pl.pallas_call(
        actor_kernel,
        out_shape=jax.ShapeDtypeStruct((b_pad, action_dim), jnp.float32),
        grid=(b_pad // tile_b,),
        in_specs=[
            # Streamed observation tiles at their native width (last dim == full array dim).
            pl.BlockSpec((tile_b, obs_dim), lambda i: (i, 0)),
            # Parameter slab: constant block index -> DMA'd once, VMEM-resident across the grid.
            pl.BlockSpec((_SLAB_ROWS, _LANE), lambda i: (0, 0)),
        ],
        # Real action width (last dim == full array dim) -> no 128-lane write amplification.
        out_specs=pl.BlockSpec((tile_b, action_dim), lambda i: (i, 0)),
        compiler_params=pltpu.CompilerParams(
            dimension_semantics=("parallel",),  # megacore sharding on v7x; no-op on v5e/v6e
        ),
    )(obs_in, packed_params)

    return out_p[:B] if b_pad != B else out_p


def init_actor_params(key, observation_dim, action_dim):
    """PyTorch-default-style uniform init. Weights stored as (in, out); biases as (out,)."""
    keys = jax.random.split(key, 6)

    def linear(kw, kb, fan_in, fan_out):
        bound = 1.0 / jnp.sqrt(jnp.float32(fan_in))
        w = jax.random.uniform(kw, (fan_in, fan_out), jnp.float32, -bound, bound)
        b = jax.random.uniform(kb, (fan_out,), jnp.float32, -bound, bound)
        return w, b

    w1, b1 = linear(keys[0], keys[1], observation_dim, _HIDDEN)
    w2, b2 = linear(keys[2], keys[3], _HIDDEN, _HIDDEN)
    w3, b3 = linear(keys[4], keys[5], _HIDDEN, action_dim)
    return {"w1": w1, "b1": b1, "w2": w2, "b2": b2, "w3": w3, "b3": b3}


def actor_reference(observation, params):
    """Pure-JAX reference (matches the PyTorch module forward)."""
    x = jnp.maximum(observation @ params["w1"] + params["b1"], 0.0)
    x = jnp.maximum(x @ params["w2"] + params["b2"], 0.0)
    return jnp.tanh(x @ params["w3"] + params["b3"])


if __name__ == "__main__":
    # BipedalWalker-v3: observation_dim=24, action_dim=4
    observation_dim, action_dim = 24, 4
    batch = 8

    key = jax.random.PRNGKey(0)
    k_obs, k_params = jax.random.split(key)

    params = init_actor_params(k_params, observation_dim, action_dim)
    packed = pack_actor_params(params, observation_dim, action_dim)  # one-time packing
    observation = jax.random.normal(k_obs, (batch, observation_dim), jnp.float32)

    out = actor_forward(observation, packed, action_dim)
    out = jax.block_until_ready(out)

    ref = actor_reference(observation, params)
    assert out.shape == (batch, action_dim), out.shape
    assert jnp.allclose(out, ref, atol=1e-5, rtol=1e-5), "Pallas output mismatch vs reference"

    # Also exercise a multi-tile / padded-batch path to validate tiling logic.
    big_B = 300
    big_obs = jax.random.normal(jax.random.PRNGKey(1), (big_B, observation_dim), jnp.float32)
    big_out = jax.block_until_ready(actor_forward(big_obs, packed, action_dim, max_tile_b=128))
    big_ref = actor_reference(big_obs, params)
    assert big_out.shape == (big_B, action_dim)
    assert jnp.allclose(big_out, big_ref, atol=1e-5, rtol=1e-5), "Pallas multi-tile mismatch"

    print("KERNEL_OK")
</pallas_src>

<mosaic_0001>
module attributes {stable_mosaic.version = 11 : i64} {
  func.func @actor_kernel(%arg0: i32, %arg1: memref<8x24xf32, #tpu.memory_space<vmem>>, %arg2: memref<392x128xf32, #tpu.memory_space<vmem>>, %arg3: memref<8x4xf32, #tpu.memory_space<vmem>>) attributes {dimension_semantics = [#tpu.dimension_semantics<parallel>], iteration_bounds = array<i64: 1>, scalar_prefetch = 0 : i64, scratch_operands = 0 : i64, tpu.core_type = #tpu.core_type<tc>, window_params = [{transform_indices = @transform_0, window_bounds = array<i64: 8, 24>}, {pipeline_mode = #tpu.pipeline_mode<synchronous>, transform_indices = @transform_1, window_bounds = array<i64: 392, 128>}, {transform_indices = @transform_2, window_bounds = array<i64: 8, 4>}]} {
    %c0 = arith.constant 0 : index
    %c0_0 = arith.constant 0 : index
    %0 = vector.load %arg1[%c0, %c0_0] : memref<8x24xf32, #tpu.memory_space<vmem>>, vector<8x24xf32>
    %c0_1 = arith.constant 0 : index
    %c0_2 = arith.constant 0 : index
    %1 = vector.load %arg2[%c0_1, %c0_2] : memref<392x128xf32, #tpu.memory_space<vmem>>, vector<24x128xf32>
    %c128 = arith.constant 128 : index
    %c0_3 = arith.constant 0 : index
    %2 = vector.load %arg2[%c128, %c0_3] : memref<392x128xf32, #tpu.memory_space<vmem>>, vector<128x128xf32>
    %c256 = arith.constant 256 : index
    %c0_4 = arith.constant 0 : index
    %3 = vector.load %arg2[%c256, %c0_4] : memref<392x128xf32, #tpu.memory_space<vmem>>, vector<128x128xf32>
    %c384 = arith.constant 384 : index
    %c0_5 = arith.constant 0 : index
    %4 = vector.load %arg2[%c384, %c0_5] : memref<392x128xf32, #tpu.memory_space<vmem>>, vector<1x128xf32>
    %c385 = arith.constant 385 : index
    %c0_6 = arith.constant 0 : index
    %5 = vector.load %arg2[%c385, %c0_6] : memref<392x128xf32, #tpu.memory_space<vmem>>, vector<1x128xf32>
    %c386 = arith.constant 386 : index
    %c0_7 = arith.constant 0 : index
    %6 = vector.load %arg2[%c386, %c0_7] : memref<392x128xf32, #tpu.memory_space<vmem>>, vector<1x128xf32>
    %cst = arith.constant dense<0.000000e+00> : vector<8x128xf32>
    %7 = tpu.matmul %0, %1, %cst {dimension_numbers = #tpu.dot_dimension_numbers<[1], [0], [0], [1], [0, 0, 1, 1], [], []>} : vector<8x24xf32>, vector<24x128xf32>, vector<8x128xf32> -> vector<8x128xf32>
    %8 = vector.broadcast %4 : vector<1x128xf32> to vector<8x128xf32>
    %9 = arith.addf %7, %8 : vector<8x128xf32>
    %cst_8 = arith.constant 0.000000e+00 : f32
    %10 = vector.broadcast %cst_8 : f32 to vector<8x128xf32>
    %11 = arith.maximumf %9, %10 : vector<8x128xf32>
    %cst_9 = arith.constant dense<0.000000e+00> : vector<8x128xf32>
    %12 = tpu.matmul %11, %2, %cst_9 {dimension_numbers = #tpu.dot_dimension_numbers<[1], [0], [0], [1], [0, 0, 1, 1], [], []>} : vector<8x128xf32>, vector<128x128xf32>, vector<8x128xf32> -> vector<8x128xf32>
    %13 = vector.broadcast %5 : vector<1x128xf32> to vector<8x128xf32>
    %14 = arith.addf %12, %13 : vector<8x128xf32>
    %cst_10 = arith.constant 0.000000e+00 : f32
    %15 = vector.broadcast %cst_10 : f32 to vector<8x128xf32>
    %16 = arith.maximumf %14, %15 : vector<8x128xf32>
    %cst_11 = arith.constant dense<0.000000e+00> : vector<8x128xf32>
    %17 = tpu.matmul %16, %3, %cst_11 {dimension_numbers = #tpu.dot_dimension_numbers<[1], [0], [0], [1], [0, 0, 1, 1], [], []>} : vector<8x128xf32>, vector<128x128xf32>, vector<8x128xf32> -> vector<8x128xf32>
    %18 = vector.broadcast %6 : vector<1x128xf32> to vector<8x128xf32>
    %19 = arith.addf %17, %18 : vector<8x128xf32>
    %20 = vector.extract_strided_slice %19 {offsets = [0, 0], sizes = [8, 4], strides = [1, 1]} : vector<8x128xf32> to vector<8x4xf32>
    %21 = math.tanh %20 : vector<8x4xf32>
    %c0_12 = arith.constant 0 : index
    %c0_13 = arith.constant 0 : index
    %22 = vector.load %arg3[%c0_12, %c0_13] : memref<8x4xf32, #tpu.memory_space<vmem>>, vector<8x4xf32>
    tpu.vector_store %arg3[%c0_12, %c0_13], %21 {strides = array<i32>} : memref<8x4xf32, #tpu.memory_space<vmem>>, vector<8x4xf32>,
    return
  }
  func.func @transform_0(%arg0: i32) -> (i32, i32) {
    %c0_i32 = arith.constant 0 : i32
    %c0_i32_0 = arith.constant 0 : i32
    return %arg0, %c0_i32 : i32, i32
  }
  func.func @transform_1(%arg0: i32) -> (i32, i32) {
    %c0_i32 = arith.constant 0 : i32
    %c0_i32_0 = arith.constant 0 : i32
    %c0_i32_1 = arith.constant 0 : i32
    return %c0_i32, %c0_i32_0 : i32, i32
  }
  func.func @transform_2(%arg0: i32) -> (i32, i32) {
    %c0_i32 = arith.constant 0 : i32
    %c0_i32_0 = arith.constant 0 : i32
    return %arg0, %c0_i32 : i32, i32
  }
}

</mosaic_0001>

<llo_original>
// kernel: tpu_custom_call.1
$region0: #{tpu_custom_call.1}
  #allocation0 [shape = 'u32[]', space=smem, size = 0x4, offset = 0x4, fixed_abs, tag = 'smem constant byte address 0x4 - core index']
  #allocation1 [shape = 'u32[144,128]{1,0:T(1,128)}', space=vmem, size = 0x12000, scoped, tag = 'internal scratch']
  %s0 = inlined_call_operand.hbm [shape: f32[8,24], index: 0, kind: input, shape index: {}]
  %s1 = inlined_call_operand.hbm [shape: f32[392,128], index: 1, kind: input, shape index: {}]
  %s2 = inlined_call_operand.vmem [shape: f32[8,4], index: 2, kind: output, shape index: {}]
  %s3 = sld [smem:[#allocation0]]
  $region26: #{tpu_custom_call.1} parent=0
    _
  %s5 = ssub.s32 1, %s3
  %s6 = scalar_select 0, %s5, %s3
  $region1: #{tpu_custom_call.1} parent=0
    #allocation2 [shape = 'u8[4096]{0}', space=vmem, size = 0x1000, scoped, tag = 'input window, operand 0, single buffered']
    #allocation3 [shape = 's32[1]{0}', space=sflag, size = 0x4, scoped, tag = 'scoped memory for tpu_custom_call.1']
    #allocation4 [shape = 'u8[200704]{0}', space=vmem, size = 0x31000, scoped, tag = 'input window, operand 1, single buffered']
    #allocation5 [shape = 's32[1]{0}', space=sflag, size = 0x4, scoped, tag = 'scoped memory for tpu_custom_call.1']
    %7 = vsyncpa [#allocation3], 0
    %8 = vsyncpa [#allocation5], 0
    // Predicated region
    $region2: #{tpu_custom_call.1} parent=1 // pred_check
      _
    $region3: #{tpu_custom_call.1} parent=1 // pred_check_branch
      %10 = sbr.rel (0) target = $region5
    $region4: #{tpu_custom_call.1} parent=1 // pred_region
      %s12 = ssub.s32 128, 128
      %13 = vsyncadd [#allocation3], %s12
      %s15 = sshll.u32 [#allocation2], 4
      %s16 = int_to_ptr.vmem [resolvable:$true] %s15
      %18 = dma.hbm_to_vmem [thread:$0]  %s0, 128, %s16, [#allocation3]
    $region5: #{tpu_custom_call.1} parent=1 // pred_fallthru
      _
    // Predicated region
    $region6: #{tpu_custom_call.1} parent=1 // pred_check
      _
    $region7: #{tpu_custom_call.1} parent=1 // pred_check_branch
      %20 = sbr.rel (0) target = $region9
    $region8: #{tpu_custom_call.1} parent=1 // pred_region
      %s22 = ssub.s32 6272, 6272
      %23 = vsyncadd [#allocation5], %s22
      %s24 = sshll.u32 [#allocation4], 4
      %s25 = int_to_ptr.vmem [resolvable:$true] %s24
      %30 = dma.hbm_to_vmem [thread:$0]  %s1, 6272, %s25, [#allocation5], 128, 128, 8
    $region9: #{tpu_custom_call.1} parent=1 // pred_fallthru
      _
    // Predicated region
    $region10: #{tpu_custom_call.1} parent=1 // pred_check
      _
    $region11: #{tpu_custom_call.1} parent=1 // pred_check_branch
      %32 = sbr.rel (0) target = $region13
    $region12: #{tpu_custom_call.1} parent=1 // pred_region
      %33 = dma.done [#allocation3], 128
    $region13: #{tpu_custom_call.1} parent=1 // pred_fallthru
      _
    // Predicated region
    $region14: #{tpu_custom_call.1} parent=1 // pred_check
      _
    $region15: #{tpu_custom_call.1} parent=1 // pred_check_branch
      %35 = sbr.rel (0) target = $region17
    $region16: #{tpu_custom_call.1} parent=1 // pred_region
      %36 = dma.done [#allocation5], 6272
    $region17: #{tpu_custom_call.1} parent=1 // pred_fallthru
      _
    %v37 = vld [vmem:[#allocation2] sm:$0xff]
    %v38 = vld [vmem:[#allocation4] sm:$0xff]
    %v39 = vld [vmem:[#allocation4 + $0x8] sm:$0xff]
    %v40 = vld [vmem:[#allocation4 + $0x10] sm:$0xff]
    %v41 = vld [vmem:[#allocation4 + $0x80] sm:$0xff]
    %v42 = vld [vmem:[#allocation4 + $0x88] sm:$0xff]
    %v43 = vld [vmem:[#allocation4 + $0x90] sm:$0xff]
    %v44 = vld [vmem:[#allocation4 + $0x98] sm:$0xff]
    %v45 = vld [vmem:[#allocation4 + $0xa0] sm:$0xff]
    %v46 = vld [vmem:[#allocation4 + $0xa8] sm:$0xff]
    %v47 = vld [vmem:[#allocation4 + $0xb0] sm:$0xff]
    %v48 = vld [vmem:[#allocation4 + $0xb8] sm:$0xff]
    %v49 = vld [vmem:[#allocation4 + $0xc0] sm:$0xff]
    %v50 = vld [vmem:[#allocation4 + $0xc8] sm:$0xff]
    %v51 = vld [vmem:[#allocation4 + $0xd0] sm:$0xff]
    %v52 = vld [vmem:[#allocation4 + $0xd8] sm:$0xff]
    %v53 = vld [vmem:[#allocation4 + $0xe0] sm:$0xff]
    %v54 = vld [vmem:[#allocation4 + $0xe8] sm:$0xff]
    %v55 = vld [vmem:[#allocation4 + $0xf0] sm:$0xff]
    %v56 = vld [vmem:[#allocation4 + $0xf8] sm:$0xff]
    %v57 = vld [vmem:[#allocation4 + $0x100] sm:$0xff]
    %v58 = vld [vmem:[#allocation4 + $0x108] sm:$0xff]
    %v59 = vld [vmem:[#allocation4 + $0x110] sm:$0xff]
    %v60 = vld [vmem:[#allocation4 + $0x118] sm:$0xff]
    %v61 = vld [vmem:[#allocation4 + $0x120] sm:$0xff]
    %v62 = vld [vmem:[#allocation4 + $0x128] sm:$0xff]
    %v63 = vld [vmem:[#allocation4 + $0x130] sm:$0xff]
    %v64 = vld [vmem:[#allocation4 + $0x138] sm:$0xff]
    %v65 = vld [vmem:[#allocation4 + $0x140] sm:$0xff]
    %v66 = vld [vmem:[#allocation4 + $0x148] sm:$0xff]
    %v67 = vld [vmem:[#allocation4 + $0x150] sm:$0xff]
    %v68 = vld [vmem:[#allocation4 + $0x158] sm:$0xff]
    %v69 = vld [vmem:[#allocation4 + $0x160] sm:$0xff]
    %v70 = vld [vmem:[#allocation4 + $0x168] sm:$0xff]
    %v71 = vld [vmem:[#allocation4 + $0x170] sm:$0xff]
    %v72 = vld [vmem:[#allocation4 + $0x178] sm:$0xff]
    %v73 = vld [vmem:[#allocation4 + $0x180] sm:$0x1]
    %v74 = vld [vmem:[#allocation4 + $0x181] sm:$0x1]
    %v75 = vld [vmem:[#allocation4 + $0x182] sm:$0x1]
    %v76 = vlaneseq
    %v77 = vshrl.u32 %v76, 7
    %v78 = vsub.s32 0, %v77
    %v79 = vrot.slane %v73, %v78
    %vm80 = vcmask 195584
    %v82 = vsel %vm80, %v37, 0
    %84 = vmatprep.subr.mxu0 0.0
    %85 = vmatpush1.msra.mxu0 0.0
    %86 = vmatprep.subr.mxu0 0.0
    %87 = vmatpush1.msra.mxu0 0.0
    %88 = vmatprep.subr.mxu0 0.0
    %89 = vmatpush1.msra.mxu0 0.0
    %90 = vmatprep.subr.mxu0 0.0
    %91 = vmatpush1.msra.mxu0 0.0
    %92 = vmatprep.subr.mxu0 0.0
    %93 = vmatpush1.msra.mxu0 0.0
    %94 = vmatprep.subr.mxu0 0.0
    %95 = vmatpush1.msra.mxu0 0.0
    %96 = vmatprep.subr.mxu0 0.0
    %97 = vmatpush1.msra.mxu0 0.0
    %98 = vmatprep.subr.mxu0 0.0
    %99 = vmatpush1.msra.mxu0 0.0
    %100 = vmatprep.subr.mxu0 0.0
    %101 = vmatpush1.msra.mxu0 0.0
    %102 = vmatprep.subr.mxu0 0.0
    %103 = vmatpush1.msra.mxu0 0.0
    %104 = vmatprep.subr.mxu0 0.0
    %105 = vmatpush1.msra.mxu0 0.0
    %106 = vmatprep.subr.mxu0 0.0
    %107 = vmatpush1.msra.mxu0 0.0
    %108 = vmatprep.subr.mxu0 0.0
    %109 = vmatpush1.msra.mxu0 0.0
    %110 = vmatprep.subr.mxu0 0.0
    %111 = vmatpush1.msra.mxu0 %v40
    %112 = vmatprep.subr.mxu0 0.0
    %113 = vmatpush1.msra.mxu0 %v39
    %114 = vmatprep.subr.mxu0 0.0
    %115 = vmatpush1.msra.mxu0 %v38
    %116 = vmatprep.subr.mxu0 0.0
    %117 = vmatpush2.msra.mxu0 0.0
    %118 = vmatprep.subr.mxu0 0.0
    %119 = vmatpush2.msra.mxu0 0.0
    %120 = vmatprep.subr.mxu0 0.0
    %121 = vmatpush2.msra.mxu0 0.0
    %122 = vmatprep.subr.mxu0 0.0
    %123 = vmatpush2.msra.mxu0 0.0
    %124 = vmatprep.subr.mxu0 0.0
    %125 = vmatpush2.msra.mxu0 0.0
    %126 = vmatprep.subr.mxu0 0.0
    %127 = vmatpush2.msra.mxu0 0.0
    %128 = vmatprep.subr.mxu0 0.0
    %129 = vmatpush2.msra.mxu0 0.0
    %130 = vmatprep.subr.mxu0 0.0
    %131 = vmatpush2.msra.mxu0 0.0
    %132 = vmatprep.subr.mxu0 0.0
    %133 = vmatpush2.msra.mxu0 0.0
    %134 = vmatprep.subr.mxu0 0.0
    %135 = vmatpush2.msra.mxu0 0.0
    %136 = vmatprep.subr.mxu0 0.0
    %137 = vmatpush2.msra.mxu0 0.0
    %138 = vmatprep.subr.mxu0 0.0
    %139 = vmatpush2.msra.mxu0 0.0
    %140 = vmatprep.subr.mxu0 0.0
    %141 = vmatpush2.msra.mxu0 0.0
    %142 = vmatprep.subr.mxu0 0.0
    %143 = vmatpush2.msra.mxu0 0.0
    %144 = vmatprep.subr.mxu0 0.0
    %145 = vmatpush2.msra.mxu0 0.0
    %146 = vmatprep.subr.mxu0 0.0
    %147 = vmatpush2.msra.mxu0 0.0
    %148 = vmatprep.mubr.f32.mxu0 0.0
    %149 = vmatmul.mubr.f32.gmra.mxu0 %v82
    %v150 = vpop.f32.mrf.mxu0
    %v151 = vadd.f32 %v79, %v150
    %v152 = vpop.f32.mrf.mxu0
    %153 = vdwg.mxu0
    %v154 = vmax.f32 %v151, 0.0
    %v155 = vlaneseq
    %v156 = vshrl.u32 %v155, 7
    %v157 = vsub.s32 0, %v156
    %v158 = vrot.slane %v74, %v157
    %159 = vmatprep.subr.mxu0 0.0
    %160 = vmatpush1.msra.mxu0 %v56
    %161 = vmatprep.subr.mxu0 0.0
    %162 = vmatpush1.msra.mxu0 %v55
    %163 = vmatprep.subr.mxu0 0.0
    %164 = vmatpush1.msra.mxu0 %v54
    %165 = vmatprep.subr.mxu0 0.0
    %166 = vmatpush1.msra.mxu0 %v53
    %167 = vmatprep.subr.mxu0 0.0
    %168 = vmatpush1.msra.mxu0 %v52
    %169 = vmatprep.subr.mxu0 0.0
    %170 = vmatpush1.msra.mxu0 %v51
    %171 = vmatprep.subr.mxu0 0.0
    %172 = vmatpush1.msra.mxu0 %v50
    %173 = vmatprep.subr.mxu0 0.0
    %174 = vmatpush1.msra.mxu0 %v49
    %175 = vmatprep.subr.mxu0 0.0
    %176 = vmatpush1.msra.mxu0 %v48
    %177 = vmatprep.subr.mxu0 0.0
    %178 = vmatpush1.msra.mxu0 %v47
    %179 = vmatprep.subr.mxu0 0.0
    %180 = vmatpush1.msra.mxu0 %v46
    %181 = vmatprep.subr.mxu0 0.0
    %182 = vmatpush1.msra.mxu0 %v45
    %183 = vmatprep.subr.mxu0 0.0
    %184 = vmatpush1.msra.mxu0 %v44
    %185 = vmatprep.subr.mxu0 0.0
    %186 = vmatpush1.msra.mxu0 %v43
    %187 = vmatprep.subr.mxu0 0.0
    %188 = vmatpush1.msra.mxu0 %v42
    %189 = vmatprep.subr.mxu0 0.0
    %190 = vmatpush1.msra.mxu0 %v41
    %191 = vmatprep.subr.mxu0 0.0
    %192 = vmatpush2.msra.mxu0 0.0
    %193 = vmatprep.subr.mxu0 0.0
    %194 = vmatpush2.msra.mxu0 0.0
    %195 = vmatprep.subr.mxu0 0.0
    %196 = vmatpush2.msra.mxu0 0.0
    %197 = vmatprep.subr.mxu0 0.0
    %198 = vmatpush2.msra.mxu0 0.0
    %199 = vmatprep.subr.mxu0 0.0
    %200 = vmatpush2.msra.mxu0 0.0
    %201 = vmatprep.subr.mxu0 0.0
    %202 = vmatpush2.msra.mxu0 0.0
    %203 = vmatprep.subr.mxu0 0.0
    %204 = vmatpush2.msra.mxu0 0.0
    %205 = vmatprep.subr.mxu0 0.0
    %206 = vmatpush2.msra.mxu0 0.0
    %207 = vmatprep.subr.mxu0 0.0
    %208 = vmatpush2.msra.mxu0 0.0
    %209 = vmatprep.subr.mxu0 0.0
    %210 = vmatpush2.msra.mxu0 0.0
    %211 = vmatprep.subr.mxu0 0.0
    %212 = vmatpush2.msra.mxu0 0.0
    %213 = vmatprep.subr.mxu0 0.0
    %214 = vmatpush2.msra.mxu0 0.0
    %215 = vmatprep.subr.mxu0 0.0
    %216 = vmatpush2.msra.mxu0 0.0
    %217 = vmatprep.subr.mxu0 0.0
    %218 = vmatpush2.msra.mxu0 0.0
    %219 = vmatprep.subr.mxu0 0.0
    %220 = vmatpush2.msra.mxu0 0.0
    %221 = vmatprep.subr.mxu0 0.0
    %222 = vmatpush2.msra.mxu0 0.0
    %223 = vmatprep.mubr.f32.mxu0 0.0
    %224 = vmatmul.mubr.f32.gmra.mxu0 %v154
    %v225 = vpop.f32.mrf.mxu0
    %v226 = vadd.f32 %v158, %v225
    %v227 = vpop.f32.mrf.mxu0
    %228 = vdwg.mxu0
    %v229 = vmax.f32 %v226, 0.0
    %v230 = vlaneseq
    %v231 = vshrl.u32 %v230, 7
    %v232 = vsub.s32 0, %v231
    %v233 = vrot.slane %v75, %v232
    %234 = vmatprep.subr.mxu0 0.0
    %235 = vmatpush1.msra.mxu0 %v72
    %236 = vmatprep.subr.mxu0 0.0
    %237 = vmatpush1.msra.mxu0 %v71
    %238 = vmatprep.subr.mxu0 0.0
    %239 = vmatpush1.msra.mxu0 %v70
    %240 = vmatprep.subr.mxu0 0.0
    %241 = vmatpush1.msra.mxu0 %v69
    %242 = vmatprep.subr.mxu0 0.0
    %243 = vmatpush1.msra.mxu0 %v68
    %244 = vmatprep.subr.mxu0 0.0
    %245 = vmatpush1.msra.mxu0 %v67
    %246 = vmatprep.subr.mxu0 0.0
    %247 = vmatpush1.msra.mxu0 %v66
    %248 = vmatprep.subr.mxu0 0.0
    %249 = vmatpush1.msra.mxu0 %v65
    %250 = vmatprep.subr.mxu0 0.0
    %251 = vmatpush1.msra.mxu0 %v64
    %252 = vmatprep.subr.mxu0 0.0
    %253 = vmatpush1.msra.mxu0 %v63
    %254 = vmatprep.subr.mxu0 0.0
    %255 = vmatpush1.msra.mxu0 %v62
    %256 = vmatprep.subr.mxu0 0.0
    %257 = vmatpush1.msra.mxu0 %v61
    %258 = vmatprep.subr.mxu0 0.0
    %259 = vmatpush1.msra.mxu0 %v60
    %260 = vmatprep.subr.mxu0 0.0
    %261 = vmatpush1.msra.mxu0 %v59
    %262 = vmatprep.subr.mxu0 0.0
    %263 = vmatpush1.msra.mxu0 %v58
    %264 = vmatprep.subr.mxu0 0.0
    %265 = vmatpush1.msra.mxu0 %v57
    %266 = vmatprep.subr.mxu0 0.0
    %267 = vmatpush2.msra.mxu0 0.0
    %268 = vmatprep.subr.mxu0 0.0
    %269 = vmatpush2.msra.mxu0 0.0
    %270 = vmatprep.subr.mxu0 0.0
    %271 = vmatpush2.msra.mxu0 0.0
    %272 = vmatprep.subr.mxu0 0.0
    %273 = vmatpush2.msra.mxu0 0.0
    %274 = vmatprep.subr.mxu0 0.0
    %275 = vmatpush2.msra.mxu0 0.0
    %276 = vmatprep.subr.mxu0 0.0
    %277 = vmatpush2.msra.mxu0 0.0
    %278 = vmatprep.subr.mxu0 0.0
    %279 = vmatpush2.msra.mxu0 0.0
    %280 = vmatprep.subr.mxu0 0.0
    %281 = vmatpush2.msra.mxu0 0.0
    %282 = vmatprep.subr.mxu0 0.0
    %283 = vmatpush2.msra.mxu0 0.0
    %284 = vmatprep.subr.mxu0 0.0
    %285 = vmatpush2.msra.mxu0 0.0
    %286 = vmatprep.subr.mxu0 0.0
    %287 = vmatpush2.msra.mxu0 0.0
    %288 = vmatprep.subr.mxu0 0.0
    %289 = vmatpush2.msra.mxu0 0.0
    %290 = vmatprep.subr.mxu0 0.0
    %291 = vmatpush2.msra.mxu0 0.0
    %292 = vmatprep.subr.mxu0 0.0
    %293 = vmatpush2.msra.mxu0 0.0
    %294 = vmatprep.subr.mxu0 0.0
    %295 = vmatpush2.msra.mxu0 0.0
    %296 = vmatprep.subr.mxu0 0.0
    %297 = vmatpush2.msra.mxu0 0.0
    %298 = vmatprep.mubr.f32.mxu0 0.0
    %299 = vmatmul.mubr.f32.gmra.mxu0 %v229
    %v300 = vpop.f32.mrf.mxu0
    %v301 = vadd.f32 %v233, %v300
    %v302 = vpop.f32.mrf.mxu0
    %303 = vdwg.mxu0
    %v304 = vtanh.pop %v301
    %vm305 = vcmask 31744
    %306 = vst.msk [vmem:[%s2] sm:$0xff] %vm305, %v304
    // Predicated region
    $region18: #{tpu_custom_call.1} parent=1 // pred_check
      _
    $region19: #{tpu_custom_call.1} parent=1 // pred_check_branch
      %308 = sbr.rel (0) target = $region21
    $region20: #{tpu_custom_call.1} parent=1 // pred_region
      _
    $region21: #{tpu_custom_call.1} parent=1 // pred_fallthru
      _
    // Predicated region
    $region22: #{tpu_custom_call.1} parent=1 // pred_check
      _
    $region23: #{tpu_custom_call.1} parent=1 // pred_check_branch
      %310 = sbr.rel (0) target = $region25
    $region24: #{tpu_custom_call.1} parent=1 // pred_region
      _
    $region25: #{tpu_custom_call.1} parent=1 // pred_fallthru
      _
    %311 = vsyncpa [#allocation3], 1
    %312 = vsyncpa [#allocation5], 1

</llo_original>
